<compile_context>
chip_gen: v6e
topology: v6e:2x2x1
jax: 0.10.0
libtpu: 0.0.40
codegen_flags: <defaults>
</compile_context>

<pallas_src>
import functools
import math

import jax
import jax.numpy as jnp
from jax.experimental import pallas as pl
from jax.experimental.pallas import tpu as pltpu

LANE = 128
SUBLANE = 8


def _round_up(n, m):
    return ((n + m - 1) // m) * m


# --------------------------------------------------------------------------
# Kernel 1: fused QKV projection, row-tiled.
# --------------------------------------------------------------------------
def _qkv_proj_kernel(dq_pad, x_ref, w_ref, q_ref, k_ref, v_ref):
    # One MXU matmul: [tr, in] @ [in, 2*dq_pad + dv_pad], f32 accumulation.
    qkv = jnp.dot(x_ref[...], w_ref[...], preferred_element_type=jnp.float32)
    # Static 128-aligned lane slices (free), stored in the compute dtype so the
    # downstream QK^T and A@V matmuls run with bf16 operands when requested.
    q_ref[...] = qkv[:, :dq_pad].astype(q_ref.dtype)
    k_ref[...] = qkv[:, dq_pad:2 * dq_pad].astype(k_ref.dtype)
    v_ref[...] = qkv[:, 2 * dq_pad:].astype(v_ref.dtype)


# --------------------------------------------------------------------------
# Kernel 2: flash-style attention with online softmax.
# --------------------------------------------------------------------------
def _flash_attn_kernel(seq_len, mask_keys,
                       q_ref, k_ref, v_ref, o_ref,
                       m_sc, l_sc, acc_sc):
    ki = pl.program_id(1)

    @pl.when(ki == 0)
    def _():
        m_sc[...] = jnp.full(m_sc.shape, -jnp.inf, m_sc.dtype)
        l_sc[...] = jnp.zeros(l_sc.shape, l_sc.dtype)
        acc_sc[...] = jnp.zeros(acc_sc.shape, acc_sc.dtype)

    # S tile = Q K^T: contract the repr axis of both operands directly (no
    # transpose materialized). Operands stay in the compute dtype (bf16 or
    # f32); accumulation is f32.  Q is already pre-scaled by 1/sqrt(dq).
    s = jax.lax.dot_general(
        q_ref[...], k_ref[...],
        dimension_numbers=(((1,), (1,)), ((), ())),
        preferred_element_type=jnp.float32,
    )
    if mask_keys:
        tk = k_ref.shape[0]
        key_idx = ki * tk + jax.lax.broadcasted_iota(jnp.int32, s.shape, 1)
        s = jnp.where(key_idx < seq_len, s, -jnp.inf)

    m_prev = m_sc[...]
    m_new = jnp.maximum(m_prev, jnp.max(s, axis=-1, keepdims=True))
    alpha = jnp.exp(m_prev - m_new)
    p = jnp.exp(s - m_new)
    l_sc[...] = alpha * l_sc[...] + jnp.sum(p, axis=-1, keepdims=True)
    acc_sc[...] = alpha * acc_sc[...] + jnp.dot(
        p.astype(v_ref.dtype), v_ref[...], preferred_element_type=jnp.float32)
    m_sc[...] = m_new

    @pl.when(ki == pl.num_programs(1) - 1)
    def _():
        out = acc_sc[...] * pl.reciprocal(l_sc[...], approx=True)
        # Output block is dv (< dv_pad) lanes wide: single masked store here
        # instead of a padded store plus an extra wrapper-side HBM slice.
        o_ref[...] = out[:, :o_ref.shape[1]].astype(o_ref.dtype)


# --------------------------------------------------------------------------
# Host-side wrappers.
# --------------------------------------------------------------------------
def pack_qkv_weights(w_q, w_k, w_v, *, compute_dtype=jnp.float32):
    """Build the packed projection matrix ONCE per parameter set (hoisted out
    of the per-call forward).  Folds the 1/sqrt(dq) scale into W_q and zero-
    pads every repr dim to a multiple of 128 lanes."""
    input_dim, dq = w_q.shape
    dv = w_v.shape[1]
    dq_pad = _round_up(dq, LANE)
    dv_pad = _round_up(dv, LANE)

    def pad_cols(w, n):
        return jnp.pad(w, ((0, 0), (0, n - w.shape[1])))

    w_qkv = jnp.concatenate(
        [pad_cols(w_q * (1.0 / math.sqrt(float(dq))), dq_pad),
         pad_cols(w_k, dq_pad),
         pad_cols(w_v, dv_pad)],
        axis=1,
    ).astype(compute_dtype)
    return w_qkv, dq, dv


def attention_layer(x, w_qkv, *, dq, dv, q_tile=256, kv_tile=256):
    """Pallas forward of AttentionLayer.  `w_qkv` is the packed matrix from
    pack_qkv_weights (its dtype is the MXU operand dtype; bf16 recommended on
    v5e/v6e/v7x).  Softmax and all accumulations stay in f32."""
    compute_dtype = w_qkv.dtype
    seq, input_dim = x.shape
    dq_pad = _round_up(dq, LANE)
    dv_pad = _round_up(dv, LANE)
    assert w_qkv.shape == (input_dim, 2 * dq_pad + dv_pad)

    # Tile sizes: multiples of 8 (sublane), capped at the requested tiles.
    tq = _round_up(min(q_tile, _round_up(seq, SUBLANE)), SUBLANE)
    tk = _round_up(min(kv_tile, _round_up(seq, SUBLANE)), SUBLANE)
    seq_pad = _round_up(seq, math.lcm(tq, tk))
    mask_keys = seq_pad != seq

    x_c = x.astype(compute_dtype)
    if mask_keys:
        x_c = jnp.pad(x_c, ((0, seq_pad - seq), (0, 0)))

    # ---- Kernel 1: fused projection, row-tiled + double-buffered DMA. ----
    q, k, v = pl.pallas_call(
        functools.partial(_qkv_proj_kernel, dq_pad),
        out_shape=(jax.ShapeDtypeStruct((seq_pad, dq_pad), compute_dtype),
                   jax.ShapeDtypeStruct((seq_pad, dq_pad), compute_dtype),
                   jax.ShapeDtypeStruct((seq_pad, dv_pad), compute_dtype)),
        grid_spec=pltpu.PrefetchScalarGridSpec(
            num_scalar_prefetch=0,
            grid=(seq_pad // tq,),
            in_specs=[
                pl.BlockSpec((tq, input_dim), lambda i: (i, 0)),
                pl.BlockSpec((input_dim, 2 * dq_pad + dv_pad),
                             lambda i: (0, 0)),
            ],
            out_specs=[
                pl.BlockSpec((tq, dq_pad), lambda i: (i, 0)),
                pl.BlockSpec((tq, dq_pad), lambda i: (i, 0)),
                pl.BlockSpec((tq, dv_pad), lambda i: (i, 0)),
            ]),
        compiler_params=pltpu.CompilerParams(
            dimension_semantics=("parallel",)),
    )(x_c, w_qkv)

    # ---- Kernel 2: flash attention over a (q-tiles, kv-tiles) grid. ----
    out = pl.pallas_call(
        functools.partial(_flash_attn_kernel, seq, mask_keys),
        out_shape=jax.ShapeDtypeStruct((seq_pad, dv), jnp.float32),
        grid_spec=pltpu.PrefetchScalarGridSpec(
            num_scalar_prefetch=0,
            grid=(seq_pad // tq, seq_pad // tk),
            in_specs=[
                pl.BlockSpec((tq, dq_pad), lambda qi, ki: (qi, 0)),
                pl.BlockSpec((tk, dq_pad), lambda qi, ki: (ki, 0)),
                pl.BlockSpec((tk, dv_pad), lambda qi, ki: (ki, 0)),
            ],
            out_specs=pl.BlockSpec((tq, dv), lambda qi, ki: (qi, 0)),
            scratch_shapes=[
                pltpu.VMEM((tq, 1), jnp.float32),      # running max m
                pltpu.VMEM((tq, 1), jnp.float32),      # running denom l
                pltpu.VMEM((tq, dv_pad), jnp.float32),  # output accumulator
            ]),
        compiler_params=pltpu.CompilerParams(
            dimension_semantics=("parallel", "arbitrary")),
    )(q, k, v)

    return out if not mask_keys else out[:seq]


# --------------------------------------------------------------------------
# Pure-JAX reference (mirrors the PyTorch module).
# --------------------------------------------------------------------------
def attention_ref(x, w_q, w_k, w_v):
    hp = jax.lax.Precision.HIGHEST
    q = jnp.matmul(x, w_q, precision=hp)
    k = jnp.matmul(x, w_k, precision=hp)
    v = jnp.matmul(x, w_v, precision=hp)
    s = jnp.matmul(q, k.T, precision=hp) / jnp.sqrt(jnp.float32(w_q.shape[1]))
    a = jax.nn.softmax(s, axis=1)
    return jnp.matmul(a, v, precision=hp)


if __name__ == "__main__":
    seq, input_dim = 8, 32
    query_repr_size = value_repr_size = 100

    key = jax.random.PRNGKey(0)
    k_x, k_q, k_k, k_v, k_x2 = jax.random.split(key, 5)

    # 0.1 * randn keeps the attention logits out of the saturated (one-hot)
    # softmax regime so that fp-tolerance comparisons are meaningful.
    x = 0.1 * jax.random.normal(k_x, (seq, input_dim), dtype=jnp.float32)
    # nn.Parameter(torch.randn(...)) -> standard-normal parameter init.
    w_q = jax.random.normal(k_q, (input_dim, query_repr_size), dtype=jnp.float32)
    w_k = jax.random.normal(k_k, (input_dim, query_repr_size), dtype=jnp.float32)
    w_v = jax.random.normal(k_v, (input_dim, value_repr_size), dtype=jnp.float32)

    ref = attention_ref(x, w_q, w_k, w_v)

    # ---- f32 operand path ----
    w_qkv_f32, dq, dv = pack_qkv_weights(w_q, w_k, w_v, compute_dtype=jnp.float32)
    fwd = jax.jit(functools.partial(attention_layer, dq=dq, dv=dv))
    out = jax.block_until_ready(fwd(x, w_qkv_f32))
    assert out.shape == (seq, value_repr_size)
    assert jnp.allclose(out, ref, atol=2e-2, rtol=2e-2)

    # ---- bf16 operand path (recommended on the v5e/v6e/v7x MXU): now checked
    # numerically against the f32 reference, not just for finiteness. ----
    w_qkv_bf16, _, _ = pack_qkv_weights(w_q, w_k, w_v, compute_dtype=jnp.bfloat16)
    out_bf16 = jax.block_until_ready(fwd(x, w_qkv_bf16))
    assert out_bf16.shape == (seq, value_repr_size)
    assert bool(jnp.isfinite(out_bf16).all())
    assert jnp.allclose(out_bf16, ref, atol=5e-2, rtol=5e-2)

    # ---- tiled + masked path: seq=384 -> seq_pad=512, 2x2 flash grid with
    # 128 padded (masked) key rows, exercising the online-softmax scratch. ----
    seq2 = 384
    x2 = 0.1 * jax.random.normal(k_x2, (seq2, input_dim), dtype=jnp.float32)
    out2 = jax.block_until_ready(fwd(x2, w_qkv_f32))
    ref2 = attention_ref(x2, w_q, w_k, w_v)
    assert out2.shape == (seq2, value_repr_size)
    assert jnp.allclose(out2, ref2, atol=2e-2, rtol=2e-2)

    print("KERNEL_OK")
</pallas_src>

<mosaic_0001>
module attributes {stable_mosaic.version = 11 : i64} {
  func.func @_qkv_proj_kernel(%arg0: i32, %arg1: memref<8x32xf32, #tpu.memory_space<vmem>>, %arg2: memref<32x384xf32, #tpu.memory_space<vmem>>, %arg3: memref<8x128xf32, #tpu.memory_space<vmem>>, %arg4: memref<8x128xf32, #tpu.memory_space<vmem>>, %arg5: memref<8x128xf32, #tpu.memory_space<vmem>>) attributes {dimension_semantics = [#tpu.dimension_semantics<parallel>], iteration_bounds = array<i64: 1>, scalar_prefetch = 0 : i64, scratch_operands = 0 : i64, tpu.core_type = #tpu.core_type<tc>, window_params = [{transform_indices = @transform_0, window_bounds = array<i64: 8, 32>}, {pipeline_mode = #tpu.pipeline_mode<synchronous>, transform_indices = @transform_1, window_bounds = array<i64: 32, 384>}, {transform_indices = @transform_2, window_bounds = array<i64: 8, 128>}, {transform_indices = @transform_3, window_bounds = array<i64: 8, 128>}, {transform_indices = @transform_4, window_bounds = array<i64: 8, 128>}]} {
    %c0 = arith.constant 0 : index
    %c0_0 = arith.constant 0 : index
    %0 = vector.load %arg1[%c0, %c0_0] : memref<8x32xf32, #tpu.memory_space<vmem>>, vector<8x32xf32>
    %c0_1 = arith.constant 0 : index
    %c0_2 = arith.constant 0 : index
    %1 = vector.load %arg2[%c0_1, %c0_2] : memref<32x384xf32, #tpu.memory_space<vmem>>, vector<32x384xf32>
    %cst = arith.constant dense<0.000000e+00> : vector<8x384xf32>
    %2 = tpu.matmul %0, %1, %cst {dimension_numbers = #tpu.dot_dimension_numbers<[1], [0], [0], [1], [0, 0, 1, 1], [], []>} : vector<8x32xf32>, vector<32x384xf32>, vector<8x384xf32> -> vector<8x384xf32>
    %3 = vector.extract_strided_slice %2 {offsets = [0, 0], sizes = [8, 128], strides = [1, 1]} : vector<8x384xf32> to vector<8x128xf32>
    %c0_3 = arith.constant 0 : index
    %c0_4 = arith.constant 0 : index
    %4 = vector.load %arg3[%c0_3, %c0_4] : memref<8x128xf32, #tpu.memory_space<vmem>>, vector<8x128xf32>
    tpu.vector_store %arg3[%c0_3, %c0_4], %3 {strides = array<i32>} : memref<8x128xf32, #tpu.memory_space<vmem>>, vector<8x128xf32>,
    %5 = vector.extract_strided_slice %2 {offsets = [0, 128], sizes = [8, 128], strides = [1, 1]} : vector<8x384xf32> to vector<8x128xf32>
    %c0_5 = arith.constant 0 : index
    %c0_6 = arith.constant 0 : index
    %6 = vector.load %arg4[%c0_5, %c0_6] : memref<8x128xf32, #tpu.memory_space<vmem>>, vector<8x128xf32>
    tpu.vector_store %arg4[%c0_5, %c0_6], %5 {strides = array<i32>} : memref<8x128xf32, #tpu.memory_space<vmem>>, vector<8x128xf32>,
    %7 = vector.extract_strided_slice %2 {offsets = [0, 256], sizes = [8, 128], strides = [1, 1]} : vector<8x384xf32> to vector<8x128xf32>
    %c0_7 = arith.constant 0 : index
    %c0_8 = arith.constant 0 : index
    %8 = vector.load %arg5[%c0_7, %c0_8] : memref<8x128xf32, #tpu.memory_space<vmem>>, vector<8x128xf32>
    tpu.vector_store %arg5[%c0_7, %c0_8], %7 {strides = array<i32>} : memref<8x128xf32, #tpu.memory_space<vmem>>, vector<8x128xf32>,
    return
  }
  func.func @transform_0(%arg0: i32) -> (i32, i32) {
    %c0_i32 = arith.constant 0 : i32
    %c0_i32_0 = arith.constant 0 : i32
    return %arg0, %c0_i32 : i32, i32
  }
  func.func @transform_1(%arg0: i32) -> (i32, i32) {
    %c0_i32 = arith.constant 0 : i32
    %c0_i32_0 = arith.constant 0 : i32
    %c0_i32_1 = arith.constant 0 : i32
    return %c0_i32, %c0_i32_0 : i32, i32
  }
  func.func @transform_2(%arg0: i32) -> (i32, i32) {
    %c0_i32 = arith.constant 0 : i32
    %c0_i32_0 = arith.constant 0 : i32
    return %arg0, %c0_i32 : i32, i32
  }
  func.func @transform_3(%arg0: i32) -> (i32, i32) {
    %c0_i32 = arith.constant 0 : i32
    %c0_i32_0 = arith.constant 0 : i32
    return %arg0, %c0_i32 : i32, i32
  }
  func.func @transform_4(%arg0: i32) -> (i32, i32) {
    %c0_i32 = arith.constant 0 : i32
    %c0_i32_0 = arith.constant 0 : i32
    return %arg0, %c0_i32 : i32, i32
  }
}

module attributes {stable_mosaic.version = 11 : i64} {
  func.func @_flash_attn_kernel(%arg0: i32, %arg1: i32, %arg2: memref<8x128xf32, #tpu.memory_space<vmem>>, %arg3: memref<8x128xf32, #tpu.memory_space<vmem>>, %arg4: memref<8x128xf32, #tpu.memory_space<vmem>>, %arg5: memref<8x100xf32, #tpu.memory_space<vmem>>, %arg6: memref<8x1xf32, #tpu.memory_space<vmem>>, %arg7: memref<8x1xf32, #tpu.memory_space<vmem>>, %arg8: memref<8x128xf32, #tpu.memory_space<vmem>>) attributes {dimension_semantics = [#tpu.dimension_semantics<parallel>, #tpu.dimension_semantics<arbitrary>], iteration_bounds = array<i64: 1, 1>, scalar_prefetch = 0 : i64, scratch_operands = 3 : i64, tpu.core_type = #tpu.core_type<tc>, window_params = [{transform_indices = @transform_0, window_bounds = array<i64: 8, 128>}, {transform_indices = @transform_1, window_bounds = array<i64: 8, 128>}, {transform_indices = @transform_2, window_bounds = array<i64: 8, 128>}, {transform_indices = @transform_3, window_bounds = array<i64: 8, 100>}]} {
    %c0_i32 = arith.constant 0 : i32
    %0 = arith.cmpi eq, %arg1, %c0_i32 : i32
    %1 = arith.extui %0 : i1 to i32
    %c0_i32_0 = arith.constant 0 : i32
    %2 = arith.cmpi ne, %1, %c0_i32_0 : i32
    scf.if %2 {
      %cst_23 = arith.constant 0xFF800000 : f32
      %32 = vector.broadcast %cst_23 : f32 to vector<8x1xf32>
      %c0_24 = arith.constant 0 : index
      %c0_25 = arith.constant 0 : index
      %33 = vector.load %arg6[%c0_24, %c0_25] : memref<8x1xf32, #tpu.memory_space<vmem>>, vector<8x1xf32>
      tpu.vector_store %arg6[%c0_24, %c0_25], %32 {strides = array<i32>} : memref<8x1xf32, #tpu.memory_space<vmem>>, vector<8x1xf32>,
      %cst_26 = arith.constant 0.000000e+00 : f32
      %34 = vector.broadcast %cst_26 : f32 to vector<8x1xf32>
      %c0_27 = arith.constant 0 : index
      %c0_28 = arith.constant 0 : index
      %35 = vector.load %arg7[%c0_27, %c0_28] : memref<8x1xf32, #tpu.memory_space<vmem>>, vector<8x1xf32>
      tpu.vector_store %arg7[%c0_27, %c0_28], %34 {strides = array<i32>} : memref<8x1xf32, #tpu.memory_space<vmem>>, vector<8x1xf32>,
      %cst_29 = arith.constant 0.000000e+00 : f32
      %36 = vector.broadcast %cst_29 : f32 to vector<8x128xf32>
      %c0_30 = arith.constant 0 : index
      %c0_31 = arith.constant 0 : index
      %37 = vector.load %arg8[%c0_30, %c0_31] : memref<8x128xf32, #tpu.memory_space<vmem>>, vector<8x128xf32>
      tpu.vector_store %arg8[%c0_30, %c0_31], %36 {strides = array<i32>} : memref<8x128xf32, #tpu.memory_space<vmem>>, vector<8x128xf32>,
    } else {
    }
    %c0 = arith.constant 0 : index
    %c0_1 = arith.constant 0 : index
    %3 = vector.load %arg2[%c0, %c0_1] : memref<8x128xf32, #tpu.memory_space<vmem>>, vector<8x128xf32>
    %c0_2 = arith.constant 0 : index
    %c0_3 = arith.constant 0 : index
    %4 = vector.load %arg3[%c0_2, %c0_3] : memref<8x128xf32, #tpu.memory_space<vmem>>, vector<8x128xf32>
    %cst = arith.constant dense<0.000000e+00> : vector<8x8xf32>
    %5 = tpu.matmul %3, %4, %cst {dimension_numbers = #tpu.dot_dimension_numbers<[1], [1], [0], [0], [0, 0, 1, 0], [], []>} : vector<8x128xf32>, vector<8x128xf32>, vector<8x8xf32> -> vector<8x8xf32>
    %c0_4 = arith.constant 0 : index
    %c0_5 = arith.constant 0 : index
    %6 = vector.load %arg6[%c0_4, %c0_5] : memref<8x1xf32, #tpu.memory_space<vmem>>, vector<8x1xf32>
    %cst_6 = arith.constant dense<0xFF800000> : vector<8xf32>
    %7 = vector.multi_reduction <maximumf>, %5, %cst_6 [1] : vector<8x8xf32> to vector<8xf32>
    %8 = vector.shape_cast %7 : vector<8xf32> to vector<8x1xf32>
    %9 = arith.maximumf %6, %8 : vector<8x1xf32>
    %10 = arith.subf %6, %9 : vector<8x1xf32>
    %11 = math.exp %10 : vector<8x1xf32>
    %12 = vector.broadcast %9 : vector<8x1xf32> to vector<8x8xf32>
    %13 = arith.subf %5, %12 : vector<8x8xf32>
    %14 = math.exp %13 : vector<8x8xf32>
    %c0_7 = arith.constant 0 : index
    %c0_8 = arith.constant 0 : index
    %15 = vector.load %arg7[%c0_7, %c0_8] : memref<8x1xf32, #tpu.memory_space<vmem>>, vector<8x1xf32>
    %16 = arith.mulf %11, %15 : vector<8x1xf32>
    %cst_9 = arith.constant dense<0.000000e+00> : vector<8xf32>
    %17 = vector.multi_reduction <add>, %14, %cst_9 [1] : vector<8x8xf32> to vector<8xf32>
    %18 = vector.shape_cast %17 : vector<8xf32> to vector<8x1xf32>
    %19 = arith.addf %16, %18 : vector<8x1xf32>
    %c0_10 = arith.constant 0 : index
    %c0_11 = arith.constant 0 : index
    %20 = vector.load %arg7[%c0_10, %c0_11] : memref<8x1xf32, #tpu.memory_space<vmem>>, vector<8x1xf32>
    tpu.vector_store %arg7[%c0_10, %c0_11], %19 {strides = array<i32>} : memref<8x1xf32, #tpu.memory_space<vmem>>, vector<8x1xf32>,
    %c0_12 = arith.constant 0 : index
    %c0_13 = arith.constant 0 : index
    %21 = vector.load %arg8[%c0_12, %c0_13] : memref<8x128xf32, #tpu.memory_space<vmem>>, vector<8x128xf32>
    %22 = vector.broadcast %11 : vector<8x1xf32> to vector<8x128xf32>
    %23 = arith.mulf %22, %21 : vector<8x128xf32>
    %c0_14 = arith.constant 0 : index
    %c0_15 = arith.constant 0 : index
    %24 = vector.load %arg4[%c0_14, %c0_15] : memref<8x128xf32, #tpu.memory_space<vmem>>, vector<8x128xf32>
    %cst_16 = arith.constant dense<0.000000e+00> : vector<8x128xf32>
    %25 = tpu.matmul %14, %24, %cst_16 {dimension_numbers = #tpu.dot_dimension_numbers<[1], [0], [0], [1], [0, 0, 1, 1], [], []>} : vector<8x8xf32>, vector<8x128xf32>, vector<8x128xf32> -> vector<8x128xf32>
    %26 = arith.addf %23, %25 : vector<8x128xf32>
    %c0_17 = arith.constant 0 : index
    %c0_18 = arith.constant 0 : index
    %27 = vector.load %arg8[%c0_17, %c0_18] : memref<8x128xf32, #tpu.memory_space<vmem>>, vector<8x128xf32>
    tpu.vector_store %arg8[%c0_17, %c0_18], %26 {strides = array<i32>} : memref<8x128xf32, #tpu.memory_space<vmem>>, vector<8x128xf32>,
    %c0_19 = arith.constant 0 : index
    %c0_20 = arith.constant 0 : index
    %28 = vector.load %arg6[%c0_19, %c0_20] : memref<8x1xf32, #tpu.memory_space<vmem>>, vector<8x1xf32>
    tpu.vector_store %arg6[%c0_19, %c0_20], %9 {strides = array<i32>} : memref<8x1xf32, #tpu.memory_space<vmem>>, vector<8x1xf32>,
    %c0_i32_21 = arith.constant 0 : i32
    %29 = arith.cmpi eq, %arg1, %c0_i32_21 : i32
    %30 = arith.extui %29 : i1 to i32
    %c0_i32_22 = arith.constant 0 : i32
    %31 = arith.cmpi ne, %30, %c0_i32_22 : i32
    scf.if %31 {
      %c0_23 = arith.constant 0 : index
      %c0_24 = arith.constant 0 : index
      %32 = vector.load %arg8[%c0_23, %c0_24] : memref<8x128xf32, #tpu.memory_space<vmem>>, vector<8x128xf32>
      %c0_25 = arith.constant 0 : index
      %c0_26 = arith.constant 0 : index
      %33 = vector.load %arg7[%c0_25, %c0_26] : memref<8x1xf32, #tpu.memory_space<vmem>>, vector<8x1xf32>
      %34 = tpu.reciprocal %33 {approx = true} : vector<8x1xf32> -> vector<8x1xf32>
      %35 = vector.broadcast %34 : vector<8x1xf32> to vector<8x128xf32>
      %36 = arith.mulf %32, %35 : vector<8x128xf32>
      %37 = vector.extract_strided_slice %36 {offsets = [0, 0], sizes = [8, 100], strides = [1, 1]} : vector<8x128xf32> to vector<8x100xf32>
      %c0_27 = arith.constant 0 : index
      %c0_28 = arith.constant 0 : index
      %38 = vector.load %arg5[%c0_27, %c0_28] : memref<8x100xf32, #tpu.memory_space<vmem>>, vector<8x100xf32>
      tpu.vector_store %arg5[%c0_27, %c0_28], %37 {strides = array<i32>} : memref<8x100xf32, #tpu.memory_space<vmem>>, vector<8x100xf32>,
    } else {
    }
    return
  }
  func.func @transform_0(%arg0: i32, %arg1: i32) -> (i32, i32) {
    %c0_i32 = arith.constant 0 : i32
    %c0_i32_0 = arith.constant 0 : i32
    return %arg0, %c0_i32 : i32, i32
  }
  func.func @transform_1(%arg0: i32, %arg1: i32) -> (i32, i32) {
    %c0_i32 = arith.constant 0 : i32
    %c0_i32_0 = arith.constant 0 : i32
    return %arg1, %c0_i32 : i32, i32
  }
  func.func @transform_2(%arg0: i32, %arg1: i32) -> (i32, i32) {
    %c0_i32 = arith.constant 0 : i32
    %c0_i32_0 = arith.constant 0 : i32
    return %arg1, %c0_i32 : i32, i32
  }
  func.func @transform_3(%arg0: i32, %arg1: i32) -> (i32, i32) {
    %c0_i32 = arith.constant 0 : i32
    %c0_i32_0 = arith.constant 0 : i32
    return %arg0, %c0_i32 : i32, i32
  }
}

</mosaic_0001>

<llo_original>
// kernel: attention_layer.3
$region0: #{attention_layer.3}
  #allocation0 [shape = 'u32[]', space=smem, size = 0x4, offset = 0x4, fixed_abs, tag = 'smem constant byte address 0x4 - core index']
  #allocation1 [shape = 'u32[144,128]{1,0:T(1,128)}', space=vmem, size = 0x12000, scoped, tag = 'internal scratch']
  #allocation2 [shape = 'f32[8,1]{1,0:T(8,128)}', space=vmem, size = 0x1000, scoped, tag = 'scratch operand']
  #allocation3 [shape = 'f32[8,1]{1,0:T(8,128)}', space=vmem, size = 0x1000, scoped, tag = 'scratch operand']
  #allocation4 [shape = 'f32[8,128]{1,0:T(8,128)}', space=vmem, size = 0x1000, scoped, tag = 'scratch operand']
  %s0 = inlined_call_operand.vmem [shape: f32[8,128], index: 0, kind: input, shape index: {}]
  %s1 = inlined_call_operand.vmem [shape: f32[8,128], index: 1, kind: input, shape index: {}]
  %s2 = inlined_call_operand.vmem [shape: f32[8,128], index: 2, kind: input, shape index: {}]
  %s3 = inlined_call_operand.hbm [shape: f32[8,100], index: 3, kind: output, shape index: {}]
  %s4 = sld [smem:[#allocation0]]
  $region30: #{attention_layer.3} parent=0
    _
  %s6 = ssub.s32 1, %s4
  %s7 = scalar_select 0, %s6, %s4
  $region1: #{attention_layer.3} parent=0
    #allocation5 [shape = 'u8[4096]{0}', space=vmem, size = 0x1000, scoped, tag = 'output window, operand 0, single buffered']
    #allocation6 [shape = 's32[1]{0}', space=sflag, size = 0x4, scoped, tag = 'scoped memory for attention_layer.3']
    %8 = vsyncpa [#allocation6], 0
    // Predicated region
    $region2: #{attention_layer.3} parent=1 // pred_check
      _
    $region3: #{attention_layer.3} parent=1 // pred_check_branch
      %10 = sbr.rel (0) target = $region5
    $region4: #{attention_layer.3} parent=1 // pred_region
      _
    $region5: #{attention_layer.3} parent=1 // pred_fallthru
      _
    // Predicated region
    $region6: #{attention_layer.3} parent=1 // pred_check
      _
    $region7: #{attention_layer.3} parent=1 // pred_check_branch
      %12 = sbr.rel (0) target = $region9
    $region8: #{attention_layer.3} parent=1 // pred_region
      _
    $region9: #{attention_layer.3} parent=1 // pred_fallthru
      _
    // Predicated region
    $region10: #{attention_layer.3} parent=1 // pred_check
      _
    $region11: #{attention_layer.3} parent=1 // pred_check_branch
      %14 = sbr.rel (0) target = $region13
    $region12: #{attention_layer.3} parent=1 // pred_region
      _
    $region13: #{attention_layer.3} parent=1 // pred_fallthru
      _
    %p15 = scmp.eq.s32.totalorder 0, 0
    // Predicated region
    $region14: #{attention_layer.3} parent=1 // pred_check
      %p16 = pneg %p15
    $region15: #{attention_layer.3} parent=1 // pred_check_branch
      %18 = sbr.rel (%p16) target = $region17
    $region16: #{attention_layer.3} parent=1 // pred_region
      %vm19 = vcmask 7168
      %20 = vst.msk [vmem:[#allocation2] sm:$0xff] %vm19, -inf
      %21 = vst.msk [vmem:[#allocation3] sm:$0xff] %vm19, 0.0
      %22 = vst [vmem:[#allocation4] sm:$0xff] 0.0
    $region17: #{attention_layer.3} parent=1 // pred_fallthru
      _
    %v23 = vld [vmem:[%s0] sm:$0xff]
    %v24 = vld [vmem:[%s1] sm:$0xff]
    %25 = vmatprep.subr.mxu0 0.0
    %26 = vmatpush1.xpose.msra.mxu0 0.0
    %27 = vmatprep.subr.mxu0 0.0
    %28 = vmatpush1.xpose.msra.mxu0 0.0
    %29 = vmatprep.subr.mxu0 0.0
    %30 = vmatpush1.xpose.msra.mxu0 0.0
    %31 = vmatprep.subr.mxu0 0.0
    %32 = vmatpush1.xpose.msra.mxu0 0.0
    %33 = vmatprep.subr.mxu0 0.0
    %34 = vmatpush1.xpose.msra.mxu0 0.0
    %35 = vmatprep.subr.mxu0 0.0
    %36 = vmatpush1.xpose.msra.mxu0 0.0
    %37 = vmatprep.subr.mxu0 0.0
    %38 = vmatpush1.xpose.msra.mxu0 0.0
    %39 = vmatprep.subr.mxu0 0.0
    %40 = vmatpush1.xpose.msra.mxu0 0.0
    %41 = vmatprep.subr.mxu0 0.0
    %42 = vmatpush1.xpose.msra.mxu0 0.0
    %43 = vmatprep.subr.mxu0 0.0
    %44 = vmatpush1.xpose.msra.mxu0 0.0
    %45 = vmatprep.subr.mxu0 0.0
    %46 = vmatpush1.xpose.msra.mxu0 0.0
    %47 = vmatprep.subr.mxu0 0.0
    %48 = vmatpush1.xpose.msra.mxu0 0.0
    %49 = vmatprep.subr.mxu0 0.0
    %50 = vmatpush1.xpose.msra.mxu0 0.0
    %51 = vmatprep.subr.mxu0 0.0
    %52 = vmatpush1.xpose.msra.mxu0 0.0
    %53 = vmatprep.subr.mxu0 0.0
    %54 = vmatpush1.xpose.msra.mxu0 0.0
    %55 = vmatprep.subr.mxu0 0.0
    %56 = vmatpush1.xpose.msra.mxu0 %v24
    %57 = vmatprep.subr.mxu0 0.0
    %58 = vmatpush2.xpose.msra.mxu0 0.0
    %59 = vmatprep.subr.mxu0 0.0
    %60 = vmatpush2.xpose.msra.mxu0 0.0
    %61 = vmatprep.subr.mxu0 0.0
    %62 = vmatpush2.xpose.msra.mxu0 0.0
    %63 = vmatprep.subr.mxu0 0.0
    %64 = vmatpush2.xpose.msra.mxu0 0.0
    %65 = vmatprep.subr.mxu0 0.0
    %66 = vmatpush2.xpose.msra.mxu0 0.0
    %67 = vmatprep.subr.mxu0 0.0
    %68 = vmatpush2.xpose.msra.mxu0 0.0
    %69 = vmatprep.subr.mxu0 0.0
    %70 = vmatpush2.xpose.msra.mxu0 0.0
    %71 = vmatprep.subr.mxu0 0.0
    %72 = vmatpush2.xpose.msra.mxu0 0.0
    %73 = vmatprep.subr.mxu0 0.0
    %74 = vmatpush2.xpose.msra.mxu0 0.0
    %75 = vmatprep.subr.mxu0 0.0
    %76 = vmatpush2.xpose.msra.mxu0 0.0
    %77 = vmatprep.subr.mxu0 0.0
    %78 = vmatpush2.xpose.msra.mxu0 0.0
    %79 = vmatprep.subr.mxu0 0.0
    %80 = vmatpush2.xpose.msra.mxu0 0.0
    %81 = vmatprep.subr.mxu0 0.0
    %82 = vmatpush2.xpose.msra.mxu0 0.0
    %83 = vmatprep.subr.mxu0 0.0
    %84 = vmatpush2.xpose.msra.mxu0 0.0
    %85 = vmatprep.subr.mxu0 0.0
    %86 = vmatpush2.xpose.msra.mxu0 0.0
    %87 = vmatprep.subr.mxu0 0.0
    %88 = vmatpush2.xpose.msra.mxu0 0.0
    %89 = vmatprep.mubr.f32.mxu0 0.0
    %90 = vmatmul.mubr.f32.gmra.mxu0 %v23
    %v91 = vpop.f32.mrf.mxu0
    %v92 = vadd.f32 0.0, %v91
    %v93 = vpop.f32.mrf.mxu0
    %94 = vdwg.mxu0
    %v95 = vld [vmem:[#allocation2] sm:$0xff]
    %vm96 = vcmask 64512
    %v97 = vsel %vm96, %v92, -inf
    %98 = vmax.xlane.f32.xlu0 %v97
    %v99 = vpop.xlane.xlu0 %98
    %v100 = vmax.f32 %v95, %v99
    %v101 = vsub.f32 %v95, %v100
    %v102 = vmul.f32 %v101, 1.442695
    %v103 = vpow.pop %v102
    %105 = vset.pattern.permute.xlu0 0
    %106 = vperm.xlu0 %105, %v100
    %v107 = vpop.permute.xlu0 %106
    %v109 = vsub.f32 %v92, %v107
    %v110 = vmul.f32 %v109, 1.442695
    %v111 = vpow.pop %v110
    %v112 = vld [vmem:[#allocation3] sm:$0xff]
    %v113 = vmul.f32 %v103, %v112
    %v114 = vsel %vm96, %v111, 0.0
    %115 = vadd.xlane.f32.xlu0 %v114
    %v116 = vpop.xlane.xlu0 %115
    %v117 = vadd.f32 %v113, %v116
    %vm118 = vcmask 7168
    %119 = vst.msk [vmem:[#allocation3] sm:$0xff] %vm118, %v117
    %v120 = vld [vmem:[#allocation4] sm:$0xff]
    %122 = vset.pattern.permute.xlu0 0
    %123 = vperm.xlu0 %122, %v103
    %v124 = vpop.permute.xlu0 %123
    %v126 = vmul.f32 %v124, %v120
    %v127 = vld [vmem:[%s2] sm:$0xff]
    %v129 = vsel %vm96, %v111, 0
    %131 = vmatprep.subr.mxu0 0.0
    %132 = vmatpush1.msra.mxu0 0.0
    %133 = vmatprep.subr.mxu0 0.0
    %134 = vmatpush1.msra.mxu0 0.0
    %135 = vmatprep.subr.mxu0 0.0
    %136 = vmatpush1.msra.mxu0 0.0
    %137 = vmatprep.subr.mxu0 0.0
    %138 = vmatpush1.msra.mxu0 0.0
    %139 = vmatprep.subr.mxu0 0.0
    %140 = vmatpush1.msra.mxu0 0.0
    %141 = vmatprep.subr.mxu0 0.0
    %142 = vmatpush1.msra.mxu0 0.0
    %143 = vmatprep.subr.mxu0 0.0
    %144 = vmatpush1.msra.mxu0 0.0
    %145 = vmatprep.subr.mxu0 0.0
    %146 = vmatpush1.msra.mxu0 0.0
    %147 = vmatprep.subr.mxu0 0.0
    %148 = vmatpush1.msra.mxu0 0.0
    %149 = vmatprep.subr.mxu0 0.0
    %150 = vmatpush1.msra.mxu0 0.0
    %151 = vmatprep.subr.mxu0 0.0
    %152 = vmatpush1.msra.mxu0 0.0
    %153 = vmatprep.subr.mxu0 0.0
    %154 = vmatpush1.msra.mxu0 0.0
    %155 = vmatprep.subr.mxu0 0.0
    %156 = vmatpush1.msra.mxu0 0.0
    %157 = vmatprep.subr.mxu0 0.0
    %158 = vmatpush1.msra.mxu0 0.0
    %159 = vmatprep.subr.mxu0 0.0
    %160 = vmatpush1.msra.mxu0 0.0
    %161 = vmatprep.subr.mxu0 0.0
    %162 = vmatpush1.msra.mxu0 %v127
    %163 = vmatprep.subr.mxu0 0.0
    %164 = vmatpush2.msra.mxu0 0.0
    %165 = vmatprep.subr.mxu0 0.0
    %166 = vmatpush2.msra.mxu0 0.0
    %167 = vmatprep.subr.mxu0 0.0
    %168 = vmatpush2.msra.mxu0 0.0
    %169 = vmatprep.subr.mxu0 0.0
    %170 = vmatpush2.msra.mxu0 0.0
    %171 = vmatprep.subr.mxu0 0.0
    %172 = vmatpush2.msra.mxu0 0.0
    %173 = vmatprep.subr.mxu0 0.0
    %174 = vmatpush2.msra.mxu0 0.0
    %175 = vmatprep.subr.mxu0 0.0
    %176 = vmatpush2.msra.mxu0 0.0
    %177 = vmatprep.subr.mxu0 0.0
    %178 = vmatpush2.msra.mxu0 0.0
    %179 = vmatprep.subr.mxu0 0.0
    %180 = vmatpush2.msra.mxu0 0.0
    %181 = vmatprep.subr.mxu0 0.0
    %182 = vmatpush2.msra.mxu0 0.0
    %183 = vmatprep.subr.mxu0 0.0
    %184 = vmatpush2.msra.mxu0 0.0
    %185 = vmatprep.subr.mxu0 0.0
    %186 = vmatpush2.msra.mxu0 0.0
    %187 = vmatprep.subr.mxu0 0.0
    %188 = vmatpush2.msra.mxu0 0.0
    %189 = vmatprep.subr.mxu0 0.0
    %190 = vmatpush2.msra.mxu0 0.0
    %191 = vmatprep.subr.mxu0 0.0
    %192 = vmatpush2.msra.mxu0 0.0
    %193 = vmatprep.subr.mxu0 0.0
    %194 = vmatpush2.msra.mxu0 0.0
    %195 = vmatprep.mubr.f32.mxu0 0.0
    %196 = vmatmul.mubr.f32.gmra.mxu0 %v129
    %v197 = vpop.f32.mrf.mxu0
    %v198 = vadd.f32 0.0, %v197
    %v199 = vpop.f32.mrf.mxu0
    %200 = vdwg.mxu0
    %v201 = vadd.f32 %v126, %v198
    %202 = vst [vmem:[#allocation4] sm:$0xff] %v201
    %203 = vst.msk [vmem:[#allocation2] sm:$0xff] %vm118, %v100
    // Predicated region
    $region18: #{attention_layer.3} parent=1 // pred_check
      %p204 = pneg %p15
    $region19: #{attention_layer.3} parent=1 // pred_check_branch
      %206 = sbr.rel (%p204) target = $region21
    $region20: #{attention_layer.3} parent=1 // pred_region
      %v207 = vld [vmem:[#allocation4] sm:$0xff]
      %v208 = vld [vmem:[#allocation3] sm:$0xff]
      %v209 = vrcp.pop %v208
      %211 = vset.pattern.permute.xlu0 0
      %212 = vperm.xlu0 %211, %v209
      %v213 = vpop.permute.xlu0 %212
      %v215 = vmul.f32 %v207, %v213
      %vm216 = vcmask 818176
      %217 = vst.msk [vmem:[#allocation5] sm:$0xff] %vm216, %v215
    $region21: #{attention_layer.3} parent=1 // pred_fallthru
      _
    // Predicated region
    $region22: #{attention_layer.3} parent=1 // pred_check
      _
    $region23: #{attention_layer.3} parent=1 // pred_check_branch
      %219 = sbr.rel (0) target = $region25
    $region24: #{attention_layer.3} parent=1 // pred_region
      %s221 = ssub.s32 128, 128
      %222 = vsyncadd [#allocation6], %s221
      %s224 = sshll.u32 [#allocation5], 4
      %s225 = int_to_ptr.vmem [resolvable:$true] %s224
      %227 = dma.vmem_to_hbm [thread:$0]  %s225, 128, %s3, [#allocation6]
    $region25: #{attention_layer.3} parent=1 // pred_fallthru
      _
    // Predicated region
    $region26: #{attention_layer.3} parent=1 // pred_check
      _
    $region27: #{attention_layer.3} parent=1 // pred_check_branch
      %229 = sbr.rel (0) target = $region29
    $region28: #{attention_layer.3} parent=1 // pred_region
      %230 = dma.done [#allocation6], 128
    $region29: #{attention_layer.3} parent=1 // pred_fallthru
      _
    %231 = vsyncpa [#allocation6], 1

// kernel: attention_layer.2
$region0: #{attention_layer.2}
  #allocation0 [shape = 'u32[]', space=smem, size = 0x4, offset = 0x4, fixed_abs, tag = 'smem constant byte address 0x4 - core index']
  #allocation1 [shape = 'u32[144,128]{1,0:T(1,128)}', space=vmem, size = 0x12000, scoped, tag = 'internal scratch']
  %s0 = inlined_call_operand.hbm [shape: f32[8,32], index: 0, kind: input, shape index: {}]
  %s1 = inlined_call_operand.hbm [shape: f32[32,384], index: 1, kind: input, shape index: {}]
  %s2 = inlined_call_operand.vmem [shape: f32[8,128], index: 2, kind: output, shape index: {0}]
  %s3 = inlined_call_operand.vmem [shape: f32[8,128], index: 3, kind: output, shape index: {1}]
  %s4 = inlined_call_operand.vmem [shape: f32[8,128], index: 4, kind: output, shape index: {2}]
  %5 = xla_tuple %s2, %s3, %s4
  %s6 = sld [smem:[#allocation0]]
  $region42: #{attention_layer.2} parent=0
    _
  %s8 = ssub.s32 1, %s6
  %s9 = scalar_select 0, %s8, %s6
  $region1: #{attention_layer.2} parent=0
    #allocation2 [shape = 'u8[4096]{0}', space=vmem, size = 0x1000, scoped, tag = 'input window, operand 0, single buffered']
    #allocation3 [shape = 's32[1]{0}', space=sflag, size = 0x4, scoped, tag = 'scoped memory for attention_layer.2']
    #allocation4 [shape = 'u8[49152]{0}', space=vmem, size = 0xc000, scoped, tag = 'input window, operand 1, single buffered']
    #allocation5 [shape = 's32[1]{0}', space=sflag, size = 0x4, scoped, tag = 'scoped memory for attention_layer.2']
    %10 = vsyncpa [#allocation3], 0
    %11 = vsyncpa [#allocation5], 0
    // Predicated region
    $region2: #{attention_layer.2} parent=1 // pred_check
      _
    $region3: #{attention_layer.2} parent=1 // pred_check_branch
      %13 = sbr.rel (0) target = $region5
    $region4: #{attention_layer.2} parent=1 // pred_region
      %s15 = ssub.s32 128, 128
      %16 = vsyncadd [#allocation3], %s15
      %s18 = sshll.u32 [#allocation2], 4
      %s19 = int_to_ptr.vmem [resolvable:$true] %s18
      %21 = dma.hbm_to_vmem [thread:$0]  %s0, 128, %s19, [#allocation3]
    $region5: #{attention_layer.2} parent=1 // pred_fallthru
      _
    // Predicated region
    $region6: #{attention_layer.2} parent=1 // pred_check
      _
    $region7: #{attention_layer.2} parent=1 // pred_check_branch
      %23 = sbr.rel (0) target = $region9
    $region8: #{attention_layer.2} parent=1 // pred_region
      %s25 = ssub.s32 1536, 1536
      %26 = vsyncadd [#allocation5], %s25
      %s27 = sshll.u32 [#allocation4], 4
      %s28 = int_to_ptr.vmem [resolvable:$true] %s27
      %33 = dma.hbm_to_vmem [thread:$0]  %s1, 1536, %s28, [#allocation5], 384, 384, 24
    $region9: #{attention_layer.2} parent=1 // pred_fallthru
      _
    // Predicated region
    $region10: #{attention_layer.2} parent=1 // pred_check
      _
    $region11: #{attention_layer.2} parent=1 // pred_check_branch
      %35 = sbr.rel (0) target = $region13
    $region12: #{attention_layer.2} parent=1 // pred_region
      %36 = dma.done [#allocation3], 128
    $region13: #{attention_layer.2} parent=1 // pred_fallthru
      _
    // Predicated region
    $region14: #{attention_layer.2} parent=1 // pred_check
      _
    $region15: #{attention_layer.2} parent=1 // pred_check_branch
      %38 = sbr.rel (0) target = $region17
    $region16: #{attention_layer.2} parent=1 // pred_region
      %39 = dma.done [#allocation5], 1536
    $region17: #{attention_layer.2} parent=1 // pred_fallthru
      _
    %v40 = vld [vmem:[#allocation2] sm:$0xff]
    %v41 = vld [vmem:[#allocation4] sm:$0xff]
    %v42 = vld [vmem:[#allocation4 + $0x8] sm:$0xff]
    %v43 = vld [vmem:[#allocation4 + $0x10] sm:$0xff]
    %v44 = vld [vmem:[#allocation4 + $0x18] sm:$0xff]
    %v45 = vld [vmem:[#allocation4 + $0x20] sm:$0xff]
    %v46 = vld [vmem:[#allocation4 + $0x28] sm:$0xff]
    %v47 = vld [vmem:[#allocation4 + $0x30] sm:$0xff]
    %v48 = vld [vmem:[#allocation4 + $0x38] sm:$0xff]
    %v49 = vld [vmem:[#allocation4 + $0x40] sm:$0xff]
    %v50 = vld [vmem:[#allocation4 + $0x48] sm:$0xff]
    %v51 = vld [vmem:[#allocation4 + $0x50] sm:$0xff]
    %v52 = vld [vmem:[#allocation4 + $0x58] sm:$0xff]
    %vm53 = vcmask 261120
    %v55 = vsel %vm53, %v40, 0
    %57 = vmatprep.subr.mxu0 0.0
    %58 = vmatpush1.msra.mxu0 0.0
    %59 = vmatprep.subr.mxu0 0.0
    %60 = vmatpush1.msra.mxu0 0.0
    %61 = vmatprep.subr.mxu0 0.0
    %62 = vmatpush1.msra.mxu0 0.0
    %63 = vmatprep.subr.mxu0 0.0
    %64 = vmatpush1.msra.mxu0 0.0
    %65 = vmatprep.subr.mxu0 0.0
    %66 = vmatpush1.msra.mxu0 0.0
    %67 = vmatprep.subr.mxu0 0.0
    %68 = vmatpush1.msra.mxu0 0.0
    %69 = vmatprep.subr.mxu0 0.0
    %70 = vmatpush1.msra.mxu0 0.0
    %71 = vmatprep.subr.mxu0 0.0
    %72 = vmatpush1.msra.mxu0 0.0
    %73 = vmatprep.subr.mxu0 0.0
    %74 = vmatpush1.msra.mxu0 0.0
    %75 = vmatprep.subr.mxu0 0.0
    %76 = vmatpush1.msra.mxu0 0.0
    %77 = vmatprep.subr.mxu0 0.0
    %78 = vmatpush1.msra.mxu0 0.0
    %79 = vmatprep.subr.mxu0 0.0
    %80 = vmatpush1.msra.mxu0 0.0
    %81 = vmatprep.subr.mxu0 %v51
    %82 = vmatpush1.msra.mxu0 %v50
    %83 = vmatprep.subr.mxu0 %v48
    %84 = vmatpush1.msra.mxu0 %v47
    %85 = vmatprep.subr.mxu0 %v45
    %86 = vmatpush1.msra.mxu0 %v44
    %87 = vmatprep.subr.mxu0 %v42
    %88 = vmatpush1.msra.mxu0 %v41
    %89 = vmatprep.subr.mxu0 0.0
    %90 = vmatpush2.msra.mxu0 0.0
    %91 = vmatprep.subr.mxu0 0.0
    %92 = vmatpush2.msra.mxu0 0.0
    %93 = vmatprep.subr.mxu0 0.0
    %94 = vmatpush2.msra.mxu0 0.0
    %95 = vmatprep.subr.mxu0 0.0
    %96 = vmatpush2.msra.mxu0 0.0
    %97 = vmatprep.subr.mxu0 0.0
    %98 = vmatpush2.msra.mxu0 0.0
    %99 = vmatprep.subr.mxu0 0.0
    %100 = vmatpush2.msra.mxu0 0.0
    %101 = vmatprep.subr.mxu0 0.0
    %102 = vmatpush2.msra.mxu0 0.0
    %103 = vmatprep.subr.mxu0 0.0
    %104 = vmatpush2.msra.mxu0 0.0
    %105 = vmatprep.subr.mxu0 0.0
    %106 = vmatpush2.msra.mxu0 0.0
    %107 = vmatprep.subr.mxu0 0.0
    %108 = vmatpush2.msra.mxu0 0.0
    %109 = vmatprep.subr.mxu0 0.0
    %110 = vmatpush2.msra.mxu0 0.0
    %111 = vmatprep.subr.mxu0 0.0
    %112 = vmatpush2.msra.mxu0 0.0
    %113 = vmatprep.subr.mxu0 0.0
    %114 = vmatpush2.msra.mxu0 0.0
    %115 = vmatprep.subr.mxu0 0.0
    %116 = vmatpush2.msra.mxu0 0.0
    %117 = vmatprep.subr.mxu0 0.0
    %118 = vmatpush2.msra.mxu0 0.0
    %119 = vmatprep.subr.mxu0 0.0
    %120 = vmatpush2.msra.mxu0 0.0
    %121 = vmatprep.mubr.f32.mxu0 0.0
    %122 = vmatmul.mubr.f32.gmra.mxu0 %v55
    %v123 = vpop.f32.mrf.mxu0
    %v124 = vadd.f32 0.0, %v123
    %v125 = vpop.f32.mrf.mxu0
    %v126 = vadd.f32 0.0, %v125
    %127 = vdwg.mxu0
    %128 = vmatprep.subr.mxu0 0.0
    %129 = vmatpush1.msra.mxu0 0.0
    %130 = vmatprep.subr.mxu0 0.0
    %131 = vmatpush1.msra.mxu0 0.0
    %132 = vmatprep.subr.mxu0 0.0
    %133 = vmatpush1.msra.mxu0 0.0
    %134 = vmatprep.subr.mxu0 0.0
    %135 = vmatpush1.msra.mxu0 0.0
    %136 = vmatprep.subr.mxu0 0.0
    %137 = vmatpush1.msra.mxu0 0.0
    %138 = vmatprep.subr.mxu0 0.0
    %139 = vmatpush1.msra.mxu0 0.0
    %140 = vmatprep.subr.mxu0 0.0
    %141 = vmatpush1.msra.mxu0 0.0
    %142 = vmatprep.subr.mxu0 0.0
    %143 = vmatpush1.msra.mxu0 0.0
    %144 = vmatprep.subr.mxu0 0.0
    %145 = vmatpush1.msra.mxu0 0.0
    %146 = vmatprep.subr.mxu0 0.0
    %147 = vmatpush1.msra.mxu0 0.0
    %148 = vmatprep.subr.mxu0 0.0
    %149 = vmatpush1.msra.mxu0 0.0
    %150 = vmatprep.subr.mxu0 0.0
    %151 = vmatpush1.msra.mxu0 0.0
    %152 = vmatprep.subr.mxu0 0.0
    %153 = vmatpush1.msra.mxu0 %v52
    %154 = vmatprep.subr.mxu0 0.0
    %155 = vmatpush1.msra.mxu0 %v49
    %156 = vmatprep.subr.mxu0 0.0
    %157 = vmatpush1.msra.mxu0 %v46
    %158 = vmatprep.subr.mxu0 0.0
    %159 = vmatpush1.msra.mxu0 %v43
    %160 = vmatprep.subr.mxu0 0.0
    %161 = vmatpush2.msra.mxu0 0.0
    %162 = vmatprep.subr.mxu0 0.0
    %163 = vmatpush2.msra.mxu0 0.0
    %164 = vmatprep.subr.mxu0 0.0
    %165 = vmatpush2.msra.mxu0 0.0
    %166 = vmatprep.subr.mxu0 0.0
    %167 = vmatpush2.msra.mxu0 0.0
    %168 = vmatprep.subr.mxu0 0.0
    %169 = vmatpush2.msra.mxu0 0.0
    %170 = vmatprep.subr.mxu0 0.0
    %171 = vmatpush2.msra.mxu0 0.0
    %172 = vmatprep.subr.mxu0 0.0
    %173 = vmatpush2.msra.mxu0 0.0
    %174 = vmatprep.subr.mxu0 0.0
    %175 = vmatpush2.msra.mxu0 0.0
    %176 = vmatprep.subr.mxu0 0.0
    %177 = vmatpush2.msra.mxu0 0.0
    %178 = vmatprep.subr.mxu0 0.0
    %179 = vmatpush2.msra.mxu0 0.0
    %180 = vmatprep.subr.mxu0 0.0
    %181 = vmatpush2.msra.mxu0 0.0
    %182 = vmatprep.subr.mxu0 0.0
    %183 = vmatpush2.msra.mxu0 0.0
    %184 = vmatprep.subr.mxu0 0.0
    %185 = vmatpush2.msra.mxu0 0.0
    %186 = vmatprep.subr.mxu0 0.0
    %187 = vmatpush2.msra.mxu0 0.0
    %188 = vmatprep.subr.mxu0 0.0
    %189 = vmatpush2.msra.mxu0 0.0
    %190 = vmatprep.subr.mxu0 0.0
    %191 = vmatpush2.msra.mxu0 0.0
    %192 = vmatprep.mubr.f32.mxu0 0.0
    %193 = vmatmul.mubr.f32.gmra.mxu0 %v55
    %v194 = vpop.f32.mrf.mxu0
    %v195 = vadd.f32 0.0, %v194
    %v196 = vpop.f32.mrf.mxu0
    %197 = vdwg.mxu0
    %198 = vst [vmem:[%s2] sm:$0xff] %v124
    %199 = vst [vmem:[%s3] sm:$0xff] %v126
    %200 = vst [vmem:[%s4] sm:$0xff] %v195
    // Predicated region
    $region18: #{attention_layer.2} parent=1 // pred_check
      _
    $region19: #{attention_layer.2} parent=1 // pred_check_branch
      %202 = sbr.rel (0) target = $region21
    $region20: #{attention_layer.2} parent=1 // pred_region
      _
    $region21: #{attention_layer.2} parent=1 // pred_fallthru
      _
    // Predicated region
    $region22: #{attention_layer.2} parent=1 // pred_check
      _
    $region23: #{attention_layer.2} parent=1 // pred_check_branch
      %204 = sbr.rel (0) target = $region25
    $region24: #{attention_layer.2} parent=1 // pred_region
      _
    $region25: #{attention_layer.2} parent=1 // pred_fallthru
      _
    // Predicated region
    $region26: #{attention_layer.2} parent=1 // pred_check
      _
    $region27: #{attention_layer.2} parent=1 // pred_check_branch
      %206 = sbr.rel (0) target = $region29
    $region28: #{attention_layer.2} parent=1 // pred_region
      _
    $region29: #{attention_layer.2} parent=1 // pred_fallthru
      _
    // Predicated region
    $region30: #{attention_layer.2} parent=1 // pred_check
      _
    $region31: #{attention_layer.2} parent=1 // pred_check_branch
      %208 = sbr.rel (0) target = $region33
    $region32: #{attention_layer.2} parent=1 // pred_region
      _
    $region33: #{attention_layer.2} parent=1 // pred_fallthru
      _
    // Predicated region
    $region34: #{attention_layer.2} parent=1 // pred_check
      _
    $region35: #{attention_layer.2} parent=1 // pred_check_branch
      %210 = sbr.rel (0) target = $region37
    $region36: #{attention_layer.2} parent=1 // pred_region
      _
    $region37: #{attention_layer.2} parent=1 // pred_fallthru
      _
    // Predicated region
    $region38: #{attention_layer.2} parent=1 // pred_check
      _
    $region39: #{attention_layer.2} parent=1 // pred_check_branch
      %212 = sbr.rel (0) target = $region41
    $region40: #{attention_layer.2} parent=1 // pred_region
      _
    $region41: #{attention_layer.2} parent=1 // pred_fallthru
      _
    %213 = vsyncpa [#allocation3], 1
    %214 = vsyncpa [#allocation5], 1

</llo_original>
